<compile_context>
chip_gen: v6e
topology: v6e:2x2x1
jax: 0.10.0
libtpu: 0.0.40
codegen_flags: <defaults>
</compile_context>

<pallas_src>
import functools

import jax
import jax.numpy as jnp
from jax import lax
from jax.experimental import pallas as pl
from jax.experimental.pallas import tpu as pltpu


def _make_kernel(N, C_out, K, L_out, T, has_skip):
    """Fused deconv + BN(train) + ReLU + linear-interp (+ skip concat) kernel."""

    def kernel(xp_ref, wblk_ref, gamma_ref, beta_ref, a_ref, *rest):
        if has_skip:
            skip_ref, o_ref = rest
        else:
            (o_ref,) = rest

        # ---- in-kernel im2col: K static lane-shifted slices per sample --------
        xp = xp_ref[...]                                   # (N, C_in, L_out+K-1)
        rows = []
        for n in range(N):
            for k in range(K):
                rows.append(xp[n, :, k:k + L_out])         # (C_in, L_out)
        xcol = jnp.concatenate(rows, axis=0)               # (N*K*C_in, L_out)

        # ---- ConvTranspose1d: ONE block-diagonal GEMM -> (N*C_out, L_out) -----
        y = jnp.dot(wblk_ref[...], xcol,
                    preferred_element_type=jnp.float32)    # f32 accumulate

        # ---- BatchNorm1d, training-mode batch stats per channel over (N, L) ---
        # TODO(synk): running_mean/running_var buffer updates (stateful training
        # side effect) are not replicated; forward output is unaffected.
        cnt = float(N * L_out)
        eps = 1e-5

        def fold_batch(v):                                 # (N*C_out,1)->(C_out,1)
            acc = v[0:C_out]
            for n in range(1, N):
                acc = acc + v[n * C_out:(n + 1) * C_out]
            return acc

        ssum = jnp.sum(y, axis=1, keepdims=True)           # (N*C_out, 1)
        mean = fold_batch(ssum) / cnt                      # (C_out, 1)
        mean_r = jnp.concatenate([mean] * N, axis=0)       # (N*C_out, 1)
        d = y - mean_r
        var = fold_batch(jnp.sum(d * d, axis=1, keepdims=True)) / cnt  # biased
        inv = lax.rsqrt(var + eps)
        scale_r = jnp.concatenate([gamma_ref[...] * inv] * N, axis=0)
        beta_r = jnp.concatenate([beta_ref[...]] * N, axis=0)

        # ---- ReLU (f32 elementwise; v5e has no bf16 VPU) -----------------------
        h = jnp.maximum(d * scale_r + beta_r, 0.0)         # (N*C_out, L_out)

        # ---- linear interp (align_corners=False): ONE GEMM for all samples ----
        up = jnp.dot(h.astype(a_ref.dtype), a_ref[...],
                     preferred_element_type=jnp.float32)   # (N*C_out, T)
        up = up.reshape(N, C_out, T).astype(o_ref.dtype)

        # ---- combined stores; skip concat absorbed into the kernel output -----
        if has_skip:
            o_ref[:, :C_out, :] = up
            o_ref[:, C_out:, :] = skip_ref[...].astype(o_ref.dtype)
        else:
            o_ref[...] = up

    return kernel


def _interp_matrix_T(src_len, dst_len, dtype=jnp.float32):
    """(src_len, dst_len) matrix A so that h (rows, src) @ A equals torch
    F.interpolate(h, size=dst, mode='linear', align_corners=False).
    Built with broadcasted one-hot compares (no scatter); static under jit."""
    t = jnp.arange(dst_len, dtype=jnp.float32)
    src = jnp.maximum((t + 0.5) * (src_len / dst_len) - 0.5, 0.0)
    lo = jnp.minimum(jnp.floor(src).astype(jnp.int32), src_len - 1)
    hi = jnp.minimum(lo + 1, src_len - 1)
    w_hi = src - lo.astype(jnp.float32)
    w_lo = 1.0 - w_hi
    l_idx = jnp.arange(src_len, dtype=jnp.int32)[:, None]          # (src_len, 1)
    a = (w_lo[None, :] * (l_idx == lo[None, :]).astype(jnp.float32) +
         w_hi[None, :] * (l_idx == hi[None, :]).astype(jnp.float32))
    return a.astype(dtype)


def upsampling_block(x, weight, bias, gamma, beta, stride,
                     skip=None, interp_size=None, compute_dtype=jnp.float32):
    """x: (N, C_in, L_in); weight: (C_in, C_out, K) (PyTorch ConvTranspose1d layout).

    `bias` is accepted for API parity but never enters the kernel: training-mode
    BatchNorm subtracts the per-channel batch mean right after the deconv, so a
    constant per-channel bias cancels exactly in the forward output."""
    del bias
    N, C_in, L_in = x.shape
    _, C_out, K = weight.shape
    L_out = (L_in - 1) * stride + K
    if skip is not None:
        T = skip.shape[-1]
        C_skip = skip.shape[1]
    else:
        if interp_size is None:
            raise ValueError("need skip or interp_size")
        T = interp_size
        C_skip = 0
    out_dtype = x.dtype

    # --- zero-stuffed, (K-1)-edge-padded activation (deconv == correlation of
    #     this with the flipped kernel). Only stride*x bytes are shipped; the
    #     K-fold im2col happens inside the kernel on the VMEM-resident block.
    if stride > 1:
        L_up = (L_in - 1) * stride + 1
        z = jnp.zeros((N, C_in, L_in, stride - 1), x.dtype)
        x_up = jnp.concatenate([x[..., None], z], axis=-1)
        x_up = x_up.reshape(N, C_in, L_in * stride)[..., :L_up]
    else:
        x_up = x
    x_p = jnp.pad(x_up, ((0, 0), (0, 0), (K - 1, K - 1))).astype(compute_dtype)
    # TODO(synk): polyphase (per-stride-phase) decomposition would avoid the zero
    # rows entirely (~stride x fewer MACs/bytes); only relevant at large L_in.

    # --- flipped, flattened weight; block-diagonal over batch so the whole
    #     deconv is ONE GEMM landing directly in (N*C_out, L_out) layout.
    w_colT = jnp.transpose(jnp.flip(weight, axis=2), (1, 2, 0)).reshape(C_out, K * C_in)
    w_blk = jnp.kron(jnp.eye(N, dtype=weight.dtype), w_colT).astype(compute_dtype)

    a_t = _interp_matrix_T(L_out, T, dtype=compute_dtype)       # (L_out, T)

    inputs = [x_p, w_blk,
              gamma.reshape(C_out, 1).astype(jnp.float32),
              beta.reshape(C_out, 1).astype(jnp.float32),
              a_t]
    if skip is not None:
        inputs.append(skip)

    itm = jnp.dtype(compute_dtype).itemsize
    flops = 2 * (N * C_out) * (N * K * C_in) * L_out + 2 * (N * C_out) * L_out * T
    bytes_accessed = ((x_p.size + w_blk.size + a_t.size) * itm + 2 * C_out * 4
                      + N * (C_out + C_skip) * T * jnp.dtype(out_dtype).itemsize)
    if skip is not None:
        bytes_accessed += skip.size * jnp.dtype(skip.dtype).itemsize

    vmem = pl.BlockSpec(memory_space=pltpu.MemorySpace.VMEM)
    kernel = _make_kernel(N, C_out, K, L_out, T, has_skip=skip is not None)
    return pl.pallas_call(
        kernel,
        out_shape=jax.ShapeDtypeStruct((N, C_out + C_skip, T), out_dtype),
        in_specs=[vmem] * len(inputs),
        out_specs=vmem,
        cost_estimate=pl.CostEstimate(flops=int(flops),
                                      transcendentals=int(C_out),
                                      bytes_accessed=int(bytes_accessed)),
    )(*inputs)


def _reference(x, weight, bias, gamma, beta, stride, T):
    """Pure-JAX f32 reference of the PyTorch forward (keeps the conv bias)."""
    _, _, L_in = x.shape
    _, C_out, K = weight.shape
    w_conv = jnp.flip(jnp.transpose(weight, (1, 0, 2)), axis=2)   # (C_out, C_in, K)
    y = lax.conv_general_dilated(
        x, w_conv, window_strides=(1,), padding=[(K - 1, K - 1)],
        lhs_dilation=(stride,), dimension_numbers=('NCH', 'OIH', 'NCH'),
        precision=lax.Precision.HIGHEST)
    y = y + bias[None, :, None]
    mean = jnp.mean(y, axis=(0, 2), keepdims=True)
    var = jnp.var(y, axis=(0, 2), keepdims=True)                  # biased, like BN
    h = (y - mean) * lax.rsqrt(var + 1e-5) * gamma[None, :, None] + beta[None, :, None]
    h = jnp.maximum(h, 0.0)
    a_t = _interp_matrix_T(h.shape[-1], T, dtype=jnp.float32)
    return jnp.einsum('ncl,lt->nct', h, a_t, precision=lax.Precision.HIGHEST)


if __name__ == "__main__":
    key = jax.random.PRNGKey(0)
    k1, k2, k3, k4, k5, k6 = jax.random.split(key, 6)

    N, C_in, C_out, K, stride, L_in = 2, 4, 8, 4, 2, 16
    C_skip, T_skip = 4, 40                      # skip's length drives interp size

    x = jax.random.normal(k1, (N, C_in, L_in), jnp.float32)
    skip = jax.random.normal(k2, (N, C_skip, T_skip), jnp.float32)

    bound = 1.0 / (C_in * K) ** 0.5
    weight = jax.random.uniform(k3, (C_in, C_out, K), jnp.float32, -bound, bound)
    bias = jax.random.uniform(k4, (C_out,), jnp.float32, -bound, bound)
    gamma = jax.random.uniform(k5, (C_out,), jnp.float32, 0.5, 1.5)
    beta = jax.random.uniform(k6, (C_out,), jnp.float32, -0.5, 0.5)

    # jit so the static prep (interp matrix, flipped/block-diag weight) constant
    # folds / fuses with the pallas_call instead of running as standalone XLA ops.
    fwd_f32 = jax.jit(functools.partial(upsampling_block, stride=stride,
                                        compute_dtype=jnp.float32))

    # Correctness: f32 kernel path vs pure-JAX reference (reference keeps the
    # conv bias, which also validates the bias-cancellation argument).
    out_f32 = fwd_f32(x, weight, bias, gamma, beta, skip=skip)
    ref = jnp.concatenate(
        [_reference(x, weight, bias, gamma, beta, stride, T_skip), skip], axis=1)
    err = float(jnp.max(jnp.abs(out_f32 - ref)))
    assert err < 2e-3, f"max abs err vs reference (skip path): {err}"

    # No-skip path (explicit interp_size), f32.
    T_ns = 24
    fwd_ns = jax.jit(functools.partial(upsampling_block, stride=stride,
                                       interp_size=T_ns, compute_dtype=jnp.float32))
    out_ns = fwd_ns(x, weight, bias, gamma, beta)
    err_ns = float(jnp.max(jnp.abs(out_ns - _reference(x, weight, bias, gamma,
                                                       beta, stride, T_ns))))
    assert err_ns < 2e-3, f"max abs err vs reference (no-skip path): {err_ns}"

    # Performance path: bf16 GEMM operands (MXU-native on v6e/v7x), f32 accumulate
    # and f32 BN/ReLU elementwise math (v5e-friendly).
    fwd_bf16 = jax.jit(functools.partial(upsampling_block, stride=stride,
                                         compute_dtype=jnp.bfloat16))
    out = jax.block_until_ready(fwd_bf16(x, weight, bias, gamma, beta, skip=skip))
    assert out.shape == (N, C_out + C_skip, T_skip), out.shape
    assert bool(jnp.all(jnp.isfinite(out)))
    print("KERNEL_OK")
</pallas_src>

<mosaic_0001>
module attributes {stable_mosaic.version = 11 : i64} {
  func.func @kernel(%arg0: memref<2x4x37xf32, #tpu.memory_space<vmem>>, %arg1: memref<16x32xf32, #tpu.memory_space<vmem>>, %arg2: memref<8x1xf32, #tpu.memory_space<vmem>>, %arg3: memref<8x1xf32, #tpu.memory_space<vmem>>, %arg4: memref<34x40xf32, #tpu.memory_space<vmem>>, %arg5: memref<2x4x40xf32, #tpu.memory_space<vmem>>, %arg6: memref<2x12x40xf32, #tpu.memory_space<vmem>>) attributes {dimension_semantics = [], scalar_prefetch = 0 : i64, scratch_operands = 0 : i64, tpu.core_type = #tpu.core_type<tc>} {
    %c0 = arith.constant 0 : index
    %c0_0 = arith.constant 0 : index
    %c0_1 = arith.constant 0 : index
    %0 = vector.load %arg0[%c0, %c0_0, %c0_1] : memref<2x4x37xf32, #tpu.memory_space<vmem>>, vector<2x4x37xf32>
    %1 = vector.extract_strided_slice %0 {offsets = [0, 0, 0], sizes = [1, 4, 34], strides = [1, 1, 1]} : vector<2x4x37xf32> to vector<1x4x34xf32>
    %2 = vector.shape_cast %1 : vector<1x4x34xf32> to vector<4x34xf32>
    %3 = vector.extract_strided_slice %0 {offsets = [0, 0, 1], sizes = [1, 4, 34], strides = [1, 1, 1]} : vector<2x4x37xf32> to vector<1x4x34xf32>
    %4 = vector.shape_cast %3 : vector<1x4x34xf32> to vector<4x34xf32>
    %5 = vector.extract_strided_slice %0 {offsets = [0, 0, 2], sizes = [1, 4, 34], strides = [1, 1, 1]} : vector<2x4x37xf32> to vector<1x4x34xf32>
    %6 = vector.shape_cast %5 : vector<1x4x34xf32> to vector<4x34xf32>
    %7 = vector.extract_strided_slice %0 {offsets = [0, 0, 3], sizes = [1, 4, 34], strides = [1, 1, 1]} : vector<2x4x37xf32> to vector<1x4x34xf32>
    %8 = vector.shape_cast %7 : vector<1x4x34xf32> to vector<4x34xf32>
    %9 = vector.extract_strided_slice %0 {offsets = [1, 0, 0], sizes = [1, 4, 34], strides = [1, 1, 1]} : vector<2x4x37xf32> to vector<1x4x34xf32>
    %10 = vector.shape_cast %9 : vector<1x4x34xf32> to vector<4x34xf32>
    %11 = vector.extract_strided_slice %0 {offsets = [1, 0, 1], sizes = [1, 4, 34], strides = [1, 1, 1]} : vector<2x4x37xf32> to vector<1x4x34xf32>
    %12 = vector.shape_cast %11 : vector<1x4x34xf32> to vector<4x34xf32>
    %13 = vector.extract_strided_slice %0 {offsets = [1, 0, 2], sizes = [1, 4, 34], strides = [1, 1, 1]} : vector<2x4x37xf32> to vector<1x4x34xf32>
    %14 = vector.shape_cast %13 : vector<1x4x34xf32> to vector<4x34xf32>
    %15 = vector.extract_strided_slice %0 {offsets = [1, 0, 3], sizes = [1, 4, 34], strides = [1, 1, 1]} : vector<2x4x37xf32> to vector<1x4x34xf32>
    %16 = vector.shape_cast %15 : vector<1x4x34xf32> to vector<4x34xf32>
    %17 = tpu.concatenate %2, %4, %6, %8, %10, %12, %14, %16 in 0 : vector<4x34xf32>, vector<4x34xf32>, vector<4x34xf32>, vector<4x34xf32>, vector<4x34xf32>, vector<4x34xf32>, vector<4x34xf32>, vector<4x34xf32> -> vector<32x34xf32>
    %c0_2 = arith.constant 0 : index
    %c0_3 = arith.constant 0 : index
    %18 = vector.load %arg1[%c0_2, %c0_3] : memref<16x32xf32, #tpu.memory_space<vmem>>, vector<16x32xf32>
    %cst = arith.constant dense<0.000000e+00> : vector<16x34xf32>
    %19 = tpu.matmul %18, %17, %cst {dimension_numbers = #tpu.dot_dimension_numbers<[1], [0], [0], [1], [0, 0, 1, 1], [], []>} : vector<16x32xf32>, vector<32x34xf32>, vector<16x34xf32> -> vector<16x34xf32>
    %cst_4 = arith.constant dense<0.000000e+00> : vector<16xf32>
    %20 = vector.multi_reduction <add>, %19, %cst_4 [1] : vector<16x34xf32> to vector<16xf32>
    %21 = vector.shape_cast %20 : vector<16xf32> to vector<16x1xf32>
    %22 = vector.extract_strided_slice %21 {offsets = [0, 0], sizes = [8, 1], strides = [1, 1]} : vector<16x1xf32> to vector<8x1xf32>
    %23 = vector.extract_strided_slice %21 {offsets = [8, 0], sizes = [8, 1], strides = [1, 1]} : vector<16x1xf32> to vector<8x1xf32>
    %24 = arith.addf %22, %23 : vector<8x1xf32>
    %cst_5 = arith.constant 6.800000e+01 : f32
    %25 = vector.broadcast %cst_5 : f32 to vector<8x1xf32>
    %26 = arith.divf %24, %25 : vector<8x1xf32>
    %27 = tpu.concatenate %26, %26 in 0 : vector<8x1xf32>, vector<8x1xf32> -> vector<16x1xf32>
    %28 = vector.broadcast %27 : vector<16x1xf32> to vector<16x34xf32>
    %29 = arith.subf %19, %28 : vector<16x34xf32>
    %30 = arith.mulf %29, %29 : vector<16x34xf32>
    %cst_6 = arith.constant dense<0.000000e+00> : vector<16xf32>
    %31 = vector.multi_reduction <add>, %30, %cst_6 [1] : vector<16x34xf32> to vector<16xf32>
    %32 = vector.shape_cast %31 : vector<16xf32> to vector<16x1xf32>
    %33 = vector.extract_strided_slice %32 {offsets = [0, 0], sizes = [8, 1], strides = [1, 1]} : vector<16x1xf32> to vector<8x1xf32>
    %34 = vector.extract_strided_slice %32 {offsets = [8, 0], sizes = [8, 1], strides = [1, 1]} : vector<16x1xf32> to vector<8x1xf32>
    %35 = arith.addf %33, %34 : vector<8x1xf32>
    %cst_7 = arith.constant 6.800000e+01 : f32
    %36 = vector.broadcast %cst_7 : f32 to vector<8x1xf32>
    %37 = arith.divf %35, %36 : vector<8x1xf32>
    %cst_8 = arith.constant 9.99999974E-6 : f32
    %38 = vector.broadcast %cst_8 : f32 to vector<8x1xf32>
    %39 = arith.addf %37, %38 : vector<8x1xf32>
    %40 = math.rsqrt %39 : vector<8x1xf32>
    %c0_9 = arith.constant 0 : index
    %c0_10 = arith.constant 0 : index
    %41 = vector.load %arg2[%c0_9, %c0_10] : memref<8x1xf32, #tpu.memory_space<vmem>>, vector<8x1xf32>
    %42 = arith.mulf %41, %40 : vector<8x1xf32>
    %43 = tpu.concatenate %42, %42 in 0 : vector<8x1xf32>, vector<8x1xf32> -> vector<16x1xf32>
    %c0_11 = arith.constant 0 : index
    %c0_12 = arith.constant 0 : index
    %44 = vector.load %arg3[%c0_11, %c0_12] : memref<8x1xf32, #tpu.memory_space<vmem>>, vector<8x1xf32>
    %45 = tpu.concatenate %44, %44 in 0 : vector<8x1xf32>, vector<8x1xf32> -> vector<16x1xf32>
    %46 = vector.broadcast %43 : vector<16x1xf32> to vector<16x34xf32>
    %47 = arith.mulf %29, %46 : vector<16x34xf32>
    %48 = vector.broadcast %45 : vector<16x1xf32> to vector<16x34xf32>
    %49 = arith.addf %47, %48 : vector<16x34xf32>
    %cst_13 = arith.constant 0.000000e+00 : f32
    %50 = vector.broadcast %cst_13 : f32 to vector<16x34xf32>
    %51 = arith.maximumf %49, %50 : vector<16x34xf32>
    %c0_14 = arith.constant 0 : index
    %c0_15 = arith.constant 0 : index
    %52 = vector.load %arg4[%c0_14, %c0_15] : memref<34x40xf32, #tpu.memory_space<vmem>>, vector<34x40xf32>
    %cst_16 = arith.constant dense<0.000000e+00> : vector<16x40xf32>
    %53 = tpu.matmul %51, %52, %cst_16 {dimension_numbers = #tpu.dot_dimension_numbers<[1], [0], [0], [1], [0, 0, 1, 1], [], []>} : vector<16x34xf32>, vector<34x40xf32>, vector<16x40xf32> -> vector<16x40xf32>
    %54 = vector.shape_cast %53 : vector<16x40xf32> to vector<2x8x40xf32>
    %c0_17 = arith.constant 0 : index
    %c0_18 = arith.constant 0 : index
    %c0_19 = arith.constant 0 : index
    %55 = vector.load %arg6[%c0_17, %c0_18, %c0_19] : memref<2x12x40xf32, #tpu.memory_space<vmem>>, vector<2x8x40xf32>
    tpu.vector_store %arg6[%c0_17, %c0_18, %c0_19], %54 {strides = array<i32>} : memref<2x12x40xf32, #tpu.memory_space<vmem>>, vector<2x8x40xf32>,
    %c0_20 = arith.constant 0 : index
    %c0_21 = arith.constant 0 : index
    %c0_22 = arith.constant 0 : index
    %56 = vector.load %arg5[%c0_20, %c0_21, %c0_22] : memref<2x4x40xf32, #tpu.memory_space<vmem>>, vector<2x4x40xf32>
    %c0_23 = arith.constant 0 : index
    %c8 = arith.constant 8 : index
    %c0_24 = arith.constant 0 : index
    %57 = vector.load %arg6[%c0_23, %c8, %c0_24] : memref<2x12x40xf32, #tpu.memory_space<vmem>>, vector<2x4x40xf32>
    tpu.vector_store %arg6[%c0_23, %c8, %c0_24], %56 {strides = array<i32>} : memref<2x12x40xf32, #tpu.memory_space<vmem>>, vector<2x4x40xf32>,
    return
  }
}

</mosaic_0001>

<llo_original>
// kernel: upsampling_block.1
$region0: #{upsampling_block.1}
  #allocation0 [shape = 'u32[]', space=smem, size = 0x4, offset = 0x4, fixed_abs, tag = 'smem constant byte address 0x4 - core index']
  #allocation1 [shape = 'u32[144,128]{1,0:T(1,128)}', space=vmem, size = 0x12000, scoped, tag = 'internal scratch']
  %s0 = inlined_call_operand.vmem [shape: f32[2,4,37], index: 0, kind: input, shape index: {}]
  %s1 = inlined_call_operand.vmem [shape: f32[16,32], index: 1, kind: input, shape index: {}]
  %s2 = inlined_call_operand.vmem [shape: f32[8,1], index: 2, kind: input, shape index: {}]
  %s3 = inlined_call_operand.vmem [shape: f32[8,1], index: 3, kind: input, shape index: {}]
  %s4 = inlined_call_operand.vmem [shape: f32[34,40], index: 4, kind: input, shape index: {}]
  %s5 = inlined_call_operand.vmem [shape: f32[2,4,40], index: 5, kind: input, shape index: {}]
  %s6 = inlined_call_operand.vmem [shape: f32[2,12,40], index: 6, kind: output, shape index: {}]
  %s7 = sld [smem:[#allocation0]]
  $region34: #{upsampling_block.1} parent=0
    _
  %s9 = ssub.s32 1, %s7
  %s10 = scalar_select 0, %s9, %s7
  // Predicated region
  $region2: #{upsampling_block.1} parent=0 // pred_check
    _
  $region3: #{upsampling_block.1} parent=0 // pred_check_branch
    %12 = sbr.rel (0) target = $region5
  $region4: #{upsampling_block.1} parent=0 // pred_region
    _
  $region5: #{upsampling_block.1} parent=0 // pred_fallthru
    _
  // Predicated region
  $region6: #{upsampling_block.1} parent=0 // pred_check
    _
  $region7: #{upsampling_block.1} parent=0 // pred_check_branch
    %14 = sbr.rel (0) target = $region9
  $region8: #{upsampling_block.1} parent=0 // pred_region
    _
  $region9: #{upsampling_block.1} parent=0 // pred_fallthru
    _
  // Predicated region
  $region10: #{upsampling_block.1} parent=0 // pred_check
    _
  $region11: #{upsampling_block.1} parent=0 // pred_check_branch
    %16 = sbr.rel (0) target = $region13
  $region12: #{upsampling_block.1} parent=0 // pred_region
    _
  $region13: #{upsampling_block.1} parent=0 // pred_fallthru
    _
  // Predicated region
  $region14: #{upsampling_block.1} parent=0 // pred_check
    _
  $region15: #{upsampling_block.1} parent=0 // pred_check_branch
    %18 = sbr.rel (0) target = $region17
  $region16: #{upsampling_block.1} parent=0 // pred_region
    _
  $region17: #{upsampling_block.1} parent=0 // pred_fallthru
    _
  // Predicated region
  $region18: #{upsampling_block.1} parent=0 // pred_check
    _
  $region19: #{upsampling_block.1} parent=0 // pred_check_branch
    %20 = sbr.rel (0) target = $region21
  $region20: #{upsampling_block.1} parent=0 // pred_region
    _
  $region21: #{upsampling_block.1} parent=0 // pred_fallthru
    _
  // Predicated region
  $region22: #{upsampling_block.1} parent=0 // pred_check
    _
  $region23: #{upsampling_block.1} parent=0 // pred_check_branch
    %22 = sbr.rel (0) target = $region25
  $region24: #{upsampling_block.1} parent=0 // pred_region
    _
  $region25: #{upsampling_block.1} parent=0 // pred_fallthru
    _
  %v23 = vld [vmem:[%s0] sm:$0xf]
  %v24 = vld [vmem:[%s0 + $0x4] sm:$0xf]
  %v26 = vrot.slane %v23, 4
  %27 = vrot.lane.b32.xlu0 %v26, 127
  %v28 = vpop.permute.xlu0 %27
  %30 = vrot.lane.b32.xlu0 %v23, 126
  %v31 = vpop.permute.xlu0 %30
  %33 = vrot.lane.b32.xlu0 %v26, 125
  %v34 = vpop.permute.xlu0 %33
  %v37 = vrot.slane %v24, 4
  %38 = vrot.lane.b32.xlu0 %v37, 127
  %v39 = vpop.permute.xlu0 %38
  %41 = vrot.lane.b32.xlu0 %v24, 126
  %v42 = vpop.permute.xlu0 %41
  %44 = vrot.lane.b32.xlu0 %v37, 125
  %v45 = vpop.permute.xlu0 %44
  %vm47 = vcmask 1043456
  %v48 = vsel %vm47, %v23, %v28
  %v49 = vsel %vm47, %v31, %v34
  %v50 = vsel %vm47, %v24, %v39
  %v51 = vsel %vm47, %v42, %v45
  %v52 = vld [vmem:[%s1] sm:$0xff]
  %v53 = vld [vmem:[%s1 + $0x8] sm:$0xff]
  %vm54 = vcmask 261120
  %v56 = vsel %vm54, %v52, 0
  %v59 = vsel %vm54, %v53, 0
  %61 = vmatprep.subr.mxu0 0.0
  %62 = vmatpush1.msra.mxu0 0.0
  %63 = vmatprep.subr.mxu0 0.0
  %64 = vmatpush1.msra.mxu0 0.0
  %65 = vmatprep.subr.mxu0 0.0
  %66 = vmatpush1.msra.mxu0 0.0
  %67 = vmatprep.subr.mxu0 0.0
  %68 = vmatpush1.msra.mxu0 0.0
  %69 = vmatprep.subr.mxu0 0.0
  %70 = vmatpush1.msra.mxu0 0.0
  %71 = vmatprep.subr.mxu0 0.0
  %72 = vmatpush1.msra.mxu0 0.0
  %73 = vmatprep.subr.mxu0 0.0
  %74 = vmatpush1.msra.mxu0 0.0
  %75 = vmatprep.subr.mxu0 0.0
  %76 = vmatpush1.msra.mxu0 0.0
  %77 = vmatprep.subr.mxu0 0.0
  %78 = vmatpush1.msra.mxu0 0.0
  %79 = vmatprep.subr.mxu0 0.0
  %80 = vmatpush1.msra.mxu0 0.0
  %81 = vmatprep.subr.mxu0 0.0
  %82 = vmatpush1.msra.mxu0 0.0
  %83 = vmatprep.subr.mxu0 0.0
  %84 = vmatpush1.msra.mxu0 0.0
  %85 = vmatprep.subr.mxu0 0.0
  %86 = vmatpush1.msra.mxu0 %v51
  %87 = vmatprep.subr.mxu0 0.0
  %88 = vmatpush1.msra.mxu0 %v50
  %89 = vmatprep.subr.mxu0 0.0
  %90 = vmatpush1.msra.mxu0 %v49
  %91 = vmatprep.subr.mxu0 0.0
  %92 = vmatpush1.msra.mxu0 %v48
  %93 = vmatprep.subr.mxu0 0.0
  %94 = vmatpush2.msra.mxu0 0.0
  %95 = vmatprep.subr.mxu0 0.0
  %96 = vmatpush2.msra.mxu0 0.0
  %97 = vmatprep.subr.mxu0 0.0
  %98 = vmatpush2.msra.mxu0 0.0
  %99 = vmatprep.subr.mxu0 0.0
  %100 = vmatpush2.msra.mxu0 0.0
  %101 = vmatprep.subr.mxu0 0.0
  %102 = vmatpush2.msra.mxu0 0.0
  %103 = vmatprep.subr.mxu0 0.0
  %104 = vmatpush2.msra.mxu0 0.0
  %105 = vmatprep.subr.mxu0 0.0
  %106 = vmatpush2.msra.mxu0 0.0
  %107 = vmatprep.subr.mxu0 0.0
  %108 = vmatpush2.msra.mxu0 0.0
  %109 = vmatprep.subr.mxu0 0.0
  %110 = vmatpush2.msra.mxu0 0.0
  %111 = vmatprep.subr.mxu0 0.0
  %112 = vmatpush2.msra.mxu0 0.0
  %113 = vmatprep.subr.mxu0 0.0
  %114 = vmatpush2.msra.mxu0 0.0
  %115 = vmatprep.subr.mxu0 0.0
  %116 = vmatpush2.msra.mxu0 0.0
  %117 = vmatprep.subr.mxu0 0.0
  %118 = vmatpush2.msra.mxu0 0.0
  %119 = vmatprep.subr.mxu0 0.0
  %120 = vmatpush2.msra.mxu0 0.0
  %121 = vmatprep.subr.mxu0 0.0
  %122 = vmatpush2.msra.mxu0 0.0
  %123 = vmatprep.subr.mxu0 0.0
  %124 = vmatpush2.msra.mxu0 0.0
  %125 = vmatprep.mubr.f32.mxu0 0.0
  %126 = vmatmul.mubr.f32.gmra.mxu0 %v56
  %v127 = vpop.f32.mrf.mxu0
  %v128 = vadd.f32 0.0, %v127
  %v129 = vpop.f32.mrf.mxu0
  %130 = vmatprep.mubr.f32.mxu0 0.0
  %131 = vmatmul.mubr.f32.gmra.mxu0 %v59
  %v132 = vpop.f32.mrf.mxu0
  %v133 = vadd.f32 0.0, %v132
  %v134 = vpop.f32.mrf.mxu0
  %135 = vdwg.mxu0
  %vm136 = vcmask 277504
  %v137 = vsel %vm136, %v128, 0.0
  %138 = vadd.xlane.f32.xlu0 %v137
  %v139 = vpop.xlane.xlu0 %138
  %v140 = vsel %vm136, %v133, 0.0
  %141 = vadd.xlane.f32.xlu0 %v140
  %v142 = vpop.xlane.xlu0 %141
  %v143 = vadd.f32 %v139, %v142
  %v144 = vrcp.pop 68.0
  %v145 = vmul.f32 %v143, %v144
  %147 = vset.pattern.permute.xlu0 0
  %148 = vperm.xlu0 %147, %v145
  %v149 = vpop.permute.xlu0 %148
  %v151 = vsub.f32 %v128, %v149
  %v152 = vsub.f32 %v133, %v149
  %v153 = vmul.f32 %v151, %v151
  %v154 = vmul.f32 %v152, %v152
  %v155 = vsel %vm136, %v153, 0.0
  %156 = vadd.xlane.f32.xlu0 %v155
  %v157 = vpop.xlane.xlu0 %156
  %v158 = vsel %vm136, %v154, 0.0
  %159 = vadd.xlane.f32.xlu0 %v158
  %v160 = vpop.xlane.xlu0 %159
  %v161 = vadd.f32 %v157, %v160
  %v162 = vmul.f32 %v161, %v144
  %v163 = vadd.f32 %v162, 1e-05
  %v164 = vrsqrt.pop %v163
  %v165 = vld [vmem:[%s2] sm:$0xff]
  %v166 = vmul.f32 %v165, %v164
  %v167 = vld [vmem:[%s3] sm:$0xff]
  %169 = vset.pattern.permute.xlu0 0
  %170 = vperm.xlu0 %169, %v166
  %v171 = vpop.permute.xlu0 %170
  %v173 = vmul.f32 %v151, %v171
  %v174 = vmul.f32 %v152, %v171
  %176 = vset.pattern.permute.xlu0 0
  %177 = vperm.xlu0 %176, %v167
  %v178 = vpop.permute.xlu0 %177
  %v180 = vadd.f32 %v173, %v178
  %v181 = vadd.f32 %v174, %v178
  %v182 = vmax.f32 %v180, 0.0
  %v183 = vmax.f32 %v181, 0.0
  %v184 = vld [vmem:[%s4] sm:$0xff]
  %v185 = vld [vmem:[%s4 + $0x8] sm:$0xff]
  %v186 = vld [vmem:[%s4 + $0x10] sm:$0xff]
  %v187 = vld [vmem:[%s4 + $0x18] sm:$0xff]
  %v188 = vld [vmem:[%s4 + $0x20] sm:$0x3]
  %v190 = vsel %vm136, %v182, 0
  %v193 = vsel %vm136, %v183, 0
  %vm195 = vcmask 1041408
  %v197 = vsel %vm195, %v188, 0
  %199 = vmatprep.subr.mxu0 0.0
  %200 = vmatpush1.msra.mxu0 0.0
  %201 = vmatprep.subr.mxu0 0.0
  %202 = vmatpush1.msra.mxu0 0.0
  %203 = vmatprep.subr.mxu0 0.0
  %204 = vmatpush1.msra.mxu0 0.0
  %205 = vmatprep.subr.mxu0 0.0
  %206 = vmatpush1.msra.mxu0 0.0
  %207 = vmatprep.subr.mxu0 0.0
  %208 = vmatpush1.msra.mxu0 0.0
  %209 = vmatprep.subr.mxu0 0.0
  %210 = vmatpush1.msra.mxu0 0.0
  %211 = vmatprep.subr.mxu0 0.0
  %212 = vmatpush1.msra.mxu0 0.0
  %213 = vmatprep.subr.mxu0 0.0
  %214 = vmatpush1.msra.mxu0 0.0
  %215 = vmatprep.subr.mxu0 0.0
  %216 = vmatpush1.msra.mxu0 0.0
  %217 = vmatprep.subr.mxu0 0.0
  %218 = vmatpush1.msra.mxu0 0.0
  %219 = vmatprep.subr.mxu0 0.0
  %220 = vmatpush1.msra.mxu0 0.0
  %221 = vmatprep.subr.mxu0 0.0
  %222 = vmatpush1.msra.mxu0 %v197
  %223 = vmatprep.subr.mxu0 0.0
  %224 = vmatpush1.msra.mxu0 %v187
  %225 = vmatprep.subr.mxu0 0.0
  %226 = vmatpush1.msra.mxu0 %v186
  %227 = vmatprep.subr.mxu0 0.0
  %228 = vmatpush1.msra.mxu0 %v185
  %229 = vmatprep.subr.mxu0 0.0
  %230 = vmatpush1.msra.mxu0 %v184
  %231 = vmatprep.subr.mxu0 0.0
  %232 = vmatpush2.msra.mxu0 0.0
  %233 = vmatprep.subr.mxu0 0.0
  %234 = vmatpush2.msra.mxu0 0.0
  %235 = vmatprep.subr.mxu0 0.0
  %236 = vmatpush2.msra.mxu0 0.0
  %237 = vmatprep.subr.mxu0 0.0
  %238 = vmatpush2.msra.mxu0 0.0
  %239 = vmatprep.subr.mxu0 0.0
  %240 = vmatpush2.msra.mxu0 0.0
  %241 = vmatprep.subr.mxu0 0.0
  %242 = vmatpush2.msra.mxu0 0.0
  %243 = vmatprep.subr.mxu0 0.0
  %244 = vmatpush2.msra.mxu0 0.0
  %245 = vmatprep.subr.mxu0 0.0
  %246 = vmatpush2.msra.mxu0 0.0
  %247 = vmatprep.subr.mxu0 0.0
  %248 = vmatpush2.msra.mxu0 0.0
  %249 = vmatprep.subr.mxu0 0.0
  %250 = vmatpush2.msra.mxu0 0.0
  %251 = vmatprep.subr.mxu0 0.0
  %252 = vmatpush2.msra.mxu0 0.0
  %253 = vmatprep.subr.mxu0 0.0
  %254 = vmatpush2.msra.mxu0 0.0
  %255 = vmatprep.subr.mxu0 0.0
  %256 = vmatpush2.msra.mxu0 0.0
  %257 = vmatprep.subr.mxu0 0.0
  %258 = vmatpush2.msra.mxu0 0.0
  %259 = vmatprep.subr.mxu0 0.0
  %260 = vmatpush2.msra.mxu0 0.0
  %261 = vmatprep.subr.mxu0 0.0
  %262 = vmatpush2.msra.mxu0 0.0
  %263 = vmatprep.mubr.f32.mxu0 0.0
  %264 = vmatmul.mubr.f32.gmra.mxu0 %v190
  %v265 = vpop.f32.mrf.mxu0
  %v266 = vadd.f32 0.0, %v265
  %v267 = vpop.f32.mrf.mxu0
  %268 = vmatprep.mubr.f32.mxu0 0.0
  %269 = vmatmul.mubr.f32.gmra.mxu0 %v193
  %v270 = vpop.f32.mrf.mxu0
  %v271 = vadd.f32 0.0, %v270
  %v272 = vpop.f32.mrf.mxu0
  %273 = vdwg.mxu0
  %vm274 = vcmask 326656
  %275 = vst.msk [vmem:[%s6] sm:$0xff] %vm274, %v266
  %276 = vst.msk [vmem:[%s6 + $0x10] sm:$0xff] %vm274, %v271
  %v277 = vld [vmem:[%s5] sm:$0xf]
  %v278 = vld [vmem:[%s5 + $0x4] sm:$0xf]
  %vm279 = vcmask 322560
  %280 = vst.msk [vmem:[%s6 + $0x8] sm:$0xf] %vm279, %v277
  %281 = vst.msk [vmem:[%s6 + $0x18] sm:$0xf] %vm279, %v278
  // Predicated region
  $region26: #{upsampling_block.1} parent=0 // pred_check
    _
  $region27: #{upsampling_block.1} parent=0 // pred_check_branch
    %283 = sbr.rel (0) target = $region29
  $region28: #{upsampling_block.1} parent=0 // pred_region
    _
  $region29: #{upsampling_block.1} parent=0 // pred_fallthru
    _
  // Predicated region
  $region30: #{upsampling_block.1} parent=0 // pred_check
    _
  $region31: #{upsampling_block.1} parent=0 // pred_check_branch
    %285 = sbr.rel (0) target = $region33
  $region32: #{upsampling_block.1} parent=0 // pred_region
    _
  $region33: #{upsampling_block.1} parent=0 // pred_fallthru
    _

</llo_original>
